<compile_context>
chip_gen: v6e
topology: v6e:2x2x1
jax: 0.10.0
libtpu: 0.0.40
codegen_flags: <defaults>
</compile_context>

<pallas_src>
import numpy as np
import jax
import jax.numpy as jnp
from jax.experimental import pallas as pl
from jax.experimental.pallas import tpu as pltpu


# ----------------------------- Pallas kernel -------------------------------

def _background_kernel(feat_ref, w1_ref, w2_ref, w3_ref, wi_ref, out_ref):
    # feat : [R*F+1, tile_n]   (lane-dense expanded features + ones carrier row)
    # w1   : [R*C+1, R*F+1]    w2 : [R*C2+1, R*C+1]   w3 : [R, R*C2+1]
    # wi   : [B*T, R]          out: [B*T, tile_n]
    h = jnp.dot(w1_ref[...], feat_ref[...], preferred_element_type=jnp.float32)
    h = jnp.where(h >= 0, h, 0.01 * h)                       # LeakyReLU(0.01)
    h = jnp.dot(w2_ref[...], h, preferred_element_type=jnp.float32)
    h = jnp.where(h >= 0, h, 0.01 * h)                       # LeakyReLU(0.01)
    bg = jax.nn.sigmoid(
        jnp.dot(w3_ref[...], h, preferred_element_type=jnp.float32))   # [R, tile_n]
    out_ref[...] = jnp.dot(wi_ref[...], bg,
                           preferred_element_type=jnp.float32).astype(out_ref.dtype)


# ------------------------------ glue / wrapper ------------------------------

def _build_interp_matrix(num_bins, num_bins_sub, dtype=np.float32):
    """[T, Tsub] matrix reproducing F.interpolate(mode='linear', align_corners=False)."""
    j = np.arange(num_bins)
    scale = num_bins_sub / num_bins
    src = (j + 0.5) * scale - 0.5
    src = np.maximum(src, 0.0)
    i0 = np.minimum(np.floor(src).astype(np.int64), num_bins_sub - 1)
    i1 = np.minimum(i0 + 1, num_bins_sub - 1)
    lam = np.clip(src - i0, 0.0, 1.0)
    m = np.zeros((num_bins, num_bins_sub), dtype=dtype)
    m[j, i0] += (1.0 - lam)
    m[j, i1] += lam
    return m


def make_params(num_pos_encodings=2, num_t_encodings=4, channels=8, seed=0):
    """Deterministic synthetic decoder parameters (PyTorch Linear default-style init)."""
    feat = 4 * num_pos_encodings + num_t_encodings
    key = jax.random.PRNGKey(seed)
    ks = jax.random.split(key, 6)

    def lin_init(kw, kb, fan_in, fan_out):
        bound = 1.0 / np.sqrt(fan_in)
        w = jax.random.uniform(kw, (fan_in, fan_out), jnp.float32, -bound, bound)
        b = jax.random.uniform(kb, (fan_out,), jnp.float32, -bound, bound)
        return w, b

    w1, b1 = lin_init(ks[0], ks[1], feat, channels)
    w2, b2 = lin_init(ks[2], ks[3], channels, channels // 2)
    w3, b3 = lin_init(ks[4], ks[5], channels // 2, 1)
    intensity = jnp.ones((1,), jnp.float32)
    return dict(w1=w1, b1=b1, w2=w2, b2=b2, w3=w3, b3=b3, intensity=intensity)


def transient_background_forward(params, scan_points, laser_points, num_bins,
                                 wall_start=(-1, -1), wall_end=(1, 1),
                                 num_pos_encodings=2, num_t_encodings=4):
    B, S, _ = scan_points.shape
    L = laser_points.shape[1]
    Tsub = max(num_bins // 8, 1)
    P = num_pos_encodings
    Tenc = num_t_encodings
    P2 = 2 * P
    F = 2 * P2 + Tenc                      # decoder input features
    R = B * Tsub                           # batch*time rows
    SL = S * L
    shift = (-min(wall_start[0], wall_end[0]), -min(wall_start[1], wall_end[1]))
    norm = (np.pi / abs(wall_start[0] - wall_end[0]),
            np.pi / abs(wall_start[1] - wall_end[1]))

    # ---- parameter-free preprocessing (mirrors the .expand / torch.cat that the
    # ---- PyTorch forward performs before the decoder) ----
    def pos_enc(pts):                       # [B, n, 3] -> [B, n, 2P]
        x = (pts[:, :, 0] + shift[0]) * norm[0]
        y = (pts[:, :, 1] + shift[1]) * norm[1]
        feats = [jnp.cos((i + 1) * x) for i in range(P)] + \
                [jnp.cos((i + 1) * y) for i in range(P)]
        return jnp.stack(feats, axis=-1).astype(jnp.float32)

    enc_s = pos_enc(scan_points)                               # [B, S, 2P]
    enc_l = pos_enc(laser_points)                              # [B, L, 2P]
    t = jnp.linspace(0.0, np.pi, Tsub)
    t_enc = jnp.stack([jnp.cos((i + 1) * t) for i in range(Tenc)],
                      axis=-1).astype(jnp.float32)             # [Tsub, Tenc]

    # Expanded, transposed feature tensor: rows = (b, t, f), lanes = (s, l).
    es = jnp.broadcast_to(jnp.transpose(enc_s, (0, 2, 1))[:, None, :, :, None],
                          (B, Tsub, P2, S, L))
    el = jnp.broadcast_to(jnp.transpose(enc_l, (0, 2, 1))[:, None, :, None, :],
                          (B, Tsub, P2, S, L))
    et = jnp.broadcast_to(t_enc[None, :, :, None, None],
                          (B, Tsub, Tenc, S, L))
    feat = jnp.concatenate([es, el, et], axis=2)               # [B, Tsub, F, S, L]
    feat = feat.reshape(R * F, SL)

    SLpad = ((SL + 127) // 128) * 128                          # lane-dense padding
    feat = jnp.pad(feat, ((0, 0), (0, SLpad - SL)))
    feat = jnp.concatenate([feat, jnp.ones((1, SLpad), jnp.float32)], axis=0)

    # ---- fold decoder params + interpolation + intensity into block matrices ----
    C = params['w1'].shape[1]
    C2 = params['w2'].shape[1]
    eyeR = jnp.eye(R, dtype=jnp.float32)

    def blockify(wT, bias, carrier):
        out_dim = wT.shape[0]
        core = jnp.kron(eyeR, wT)                                       # [R*out, R*in]
        bcol = jnp.tile(bias.reshape(-1), R).reshape(R * out_dim, 1)    # bias column
        big = jnp.concatenate([core, bcol], axis=1)
        if carrier:
            carrier_row = jnp.concatenate(
                [jnp.zeros((1, core.shape[1]), jnp.float32),
                 jnp.ones((1, 1), jnp.float32)], axis=1)
            big = jnp.concatenate([big, carrier_row], axis=0)
        return big.astype(jnp.float32)

    W1b = blockify(params['w1'].T, params['b1'], carrier=True)    # [R*C+1,  R*F+1]
    W2b = blockify(params['w2'].T, params['b2'], carrier=True)    # [R*C2+1, R*C+1]
    W3b = blockify(params['w3'].T, params['b3'], carrier=False)   # [R,      R*C2+1]

    interp = jnp.asarray(_build_interp_matrix(num_bins, Tsub))    # [T, Tsub]
    WIb = (jnp.kron(jnp.eye(B, dtype=jnp.float32), interp)
           * params['intensity'].reshape(())).astype(jnp.float32)  # [B*T, R]

    # ---- lane tiling over the (padded) S*L axis ----
    tile_n = 512 if SLpad % 512 == 0 else (256 if SLpad % 256 == 0 else 128)
    grid_n = SLpad // tile_n
    T = num_bins

    out2d = pl.pallas_call(
        _background_kernel,
        out_shape=jax.ShapeDtypeStruct((B * T, SLpad), jnp.float32),
        grid=(grid_n,),
        in_specs=[
            pl.BlockSpec((R * F + 1, tile_n), lambda j: (0, j)),       # features
            pl.BlockSpec((R * C + 1, R * F + 1), lambda j: (0, 0)),    # W1 block
            pl.BlockSpec((R * C2 + 1, R * C + 1), lambda j: (0, 0)),   # W2 block
            pl.BlockSpec((R, R * C2 + 1), lambda j: (0, 0)),           # W3 block
            pl.BlockSpec((B * T, R), lambda j: (0, 0)),                # interp*intensity
        ],
        out_specs=pl.BlockSpec((B * T, tile_n), lambda j: (0, j)),
        compiler_params=pltpu.CompilerParams(dimension_semantics=("parallel",)),
    )(feat, W1b, W2b, W3b, WIb)

    return out2d[:, :SL].reshape(B, T, S, L)


# ------------------------- pure-JAX reference (check) -----------------------

def reference_forward(params, scan_points, laser_points, num_bins,
                      wall_start=(-1, -1), wall_end=(1, 1),
                      num_pos_encodings=2, num_t_encodings=4):
    B, S, _ = scan_points.shape
    L = laser_points.shape[1]
    Tsub = max(num_bins // 8, 1)
    P = num_pos_encodings
    Tenc = num_t_encodings
    shift = (-min(wall_start[0], wall_end[0]), -min(wall_start[1], wall_end[1]))
    norm = (np.pi / abs(wall_start[0] - wall_end[0]),
            np.pi / abs(wall_start[1] - wall_end[1]))

    x_s = (scan_points[:, :, 0:1] + shift[0]) * norm[0]
    y_s = (scan_points[:, :, 1:2] + shift[1]) * norm[1]
    x_l = (laser_points[:, :, 0:1] + shift[0]) * norm[0]
    y_l = (laser_points[:, :, 1:2] + shift[1]) * norm[1]
    pe_s = jnp.concatenate([jnp.cos((i + 1) * x_s) for i in range(P)] +
                           [jnp.cos((i + 1) * y_s) for i in range(P)], axis=-1)
    pe_l = jnp.concatenate([jnp.cos((i + 1) * x_l) for i in range(P)] +
                           [jnp.cos((i + 1) * y_l) for i in range(P)], axis=-1)
    pe_s = jnp.broadcast_to(pe_s[:, None, :, None, :], (B, Tsub, S, L, 2 * P))
    pe_l = jnp.broadcast_to(pe_l[:, None, None, :, :], (B, Tsub, S, L, 2 * P))
    t = jnp.linspace(0.0, np.pi, Tsub).reshape(1, Tsub, 1, 1, 1)
    t = jnp.broadcast_to(t, (B, Tsub, S, L, 1))
    te = jnp.concatenate([jnp.cos((i + 1) * t) for i in range(Tenc)], axis=-1)
    feat = jnp.concatenate([pe_s, pe_l, te], axis=-1)

    leaky = lambda v: jnp.where(v >= 0, v, 0.01 * v)
    h = leaky(feat @ params['w1'] + params['b1'])
    h = leaky(h @ params['w2'] + params['b2'])
    bg = jax.nn.sigmoid(h @ params['w3'] + params['b3'])[..., 0]   # [B,Tsub,S,L]

    interp = jnp.asarray(_build_interp_matrix(num_bins, Tsub))
    bg2 = bg.reshape(B, Tsub, S * L)
    out = jnp.einsum('tk,bkn->btn', interp, bg2).reshape(B, num_bins, S, L)
    return params['intensity'][0] * out


# ----------------------------------- main -----------------------------------

if __name__ == "__main__":
    B, S, L = 2, 8, 8
    num_bins = 32                      # -> num_bins_sub = 4
    key = jax.random.PRNGKey(0)
    ka, kb = jax.random.split(key)
    scan_points = jax.random.uniform(ka, (B, S, 3), jnp.float32, -1.0, 1.0)
    laser_points = jax.random.uniform(kb, (B, L, 3), jnp.float32, -1.0, 1.0)

    params = make_params(num_pos_encodings=2, num_t_encodings=4, channels=8, seed=0)

    out = transient_background_forward(params, scan_points, laser_points, num_bins)
    out = jax.block_until_ready(out)
    assert out.shape == (B, num_bins, S, L)

    ref = reference_forward(params, scan_points, laser_points, num_bins)
    np.testing.assert_allclose(np.asarray(out), np.asarray(ref), rtol=5e-4, atol=5e-4)

    print("KERNEL_OK")
</pallas_src>

<mosaic_0001>
module attributes {stable_mosaic.version = 11 : i64} {
  func.func @_background_kernel(%arg0: i32, %arg1: memref<97x128xf32, #tpu.memory_space<vmem>>, %arg2: memref<65x97xf32, #tpu.memory_space<vmem>>, %arg3: memref<33x65xf32, #tpu.memory_space<vmem>>, %arg4: memref<8x33xf32, #tpu.memory_space<vmem>>, %arg5: memref<64x8xf32, #tpu.memory_space<vmem>>, %arg6: memref<64x128xf32, #tpu.memory_space<vmem>>) attributes {dimension_semantics = [#tpu.dimension_semantics<parallel>], iteration_bounds = array<i64: 1>, scalar_prefetch = 0 : i64, scratch_operands = 0 : i64, tpu.core_type = #tpu.core_type<tc>, window_params = [{transform_indices = @transform_0, window_bounds = array<i64: 97, 128>}, {pipeline_mode = #tpu.pipeline_mode<synchronous>, transform_indices = @transform_1, window_bounds = array<i64: 65, 97>}, {pipeline_mode = #tpu.pipeline_mode<synchronous>, transform_indices = @transform_2, window_bounds = array<i64: 33, 65>}, {pipeline_mode = #tpu.pipeline_mode<synchronous>, transform_indices = @transform_3, window_bounds = array<i64: 8, 33>}, {pipeline_mode = #tpu.pipeline_mode<synchronous>, transform_indices = @transform_4, window_bounds = array<i64: 64, 8>}, {transform_indices = @transform_5, window_bounds = array<i64: 64, 128>}]} {
    %c0 = arith.constant 0 : index
    %c0_0 = arith.constant 0 : index
    %0 = vector.load %arg2[%c0, %c0_0] : memref<65x97xf32, #tpu.memory_space<vmem>>, vector<65x97xf32>
    %c0_1 = arith.constant 0 : index
    %c0_2 = arith.constant 0 : index
    %1 = vector.load %arg1[%c0_1, %c0_2] : memref<97x128xf32, #tpu.memory_space<vmem>>, vector<97x128xf32>
    %cst = arith.constant dense<0.000000e+00> : vector<65x128xf32>
    %2 = tpu.matmul %0, %1, %cst {dimension_numbers = #tpu.dot_dimension_numbers<[1], [0], [0], [1], [0, 0, 1, 1], [], []>} : vector<65x97xf32>, vector<97x128xf32>, vector<65x128xf32> -> vector<65x128xf32>
    %cst_3 = arith.constant 0.000000e+00 : f32
    %3 = vector.broadcast %cst_3 : f32 to vector<65x128xf32>
    %4 = arith.cmpf oge, %2, %3 : vector<65x128xf32>
    %cst_4 = arith.constant 0.00999999977 : f32
    %5 = vector.broadcast %cst_4 : f32 to vector<65x128xf32>
    %6 = arith.mulf %5, %2 : vector<65x128xf32>
    %7 = arith.select %4, %2, %6 : vector<65x128xi1>, vector<65x128xf32>
    %c0_5 = arith.constant 0 : index
    %c0_6 = arith.constant 0 : index
    %8 = vector.load %arg3[%c0_5, %c0_6] : memref<33x65xf32, #tpu.memory_space<vmem>>, vector<33x65xf32>
    %cst_7 = arith.constant dense<0.000000e+00> : vector<33x128xf32>
    %9 = tpu.matmul %8, %7, %cst_7 {dimension_numbers = #tpu.dot_dimension_numbers<[1], [0], [0], [1], [0, 0, 1, 1], [], []>} : vector<33x65xf32>, vector<65x128xf32>, vector<33x128xf32> -> vector<33x128xf32>
    %cst_8 = arith.constant 0.000000e+00 : f32
    %10 = vector.broadcast %cst_8 : f32 to vector<33x128xf32>
    %11 = arith.cmpf oge, %9, %10 : vector<33x128xf32>
    %cst_9 = arith.constant 0.00999999977 : f32
    %12 = vector.broadcast %cst_9 : f32 to vector<33x128xf32>
    %13 = arith.mulf %12, %9 : vector<33x128xf32>
    %14 = arith.select %11, %9, %13 : vector<33x128xi1>, vector<33x128xf32>
    %c0_10 = arith.constant 0 : index
    %c0_11 = arith.constant 0 : index
    %15 = vector.load %arg4[%c0_10, %c0_11] : memref<8x33xf32, #tpu.memory_space<vmem>>, vector<8x33xf32>
    %cst_12 = arith.constant dense<0.000000e+00> : vector<8x128xf32>
    %16 = tpu.matmul %15, %14, %cst_12 {dimension_numbers = #tpu.dot_dimension_numbers<[1], [0], [0], [1], [0, 0, 1, 1], [], []>} : vector<8x33xf32>, vector<33x128xf32>, vector<8x128xf32> -> vector<8x128xf32>
    %17 = arith.negf %16 : vector<8x128xf32>
    %18 = math.exp %17 : vector<8x128xf32>
    %cst_13 = arith.constant 1.000000e+00 : f32
    %19 = vector.broadcast %cst_13 : f32 to vector<8x128xf32>
    %20 = arith.addf %19, %18 : vector<8x128xf32>
    %21 = arith.divf %19, %20 : vector<8x128xf32>
    %c0_14 = arith.constant 0 : index
    %c0_15 = arith.constant 0 : index
    %22 = vector.load %arg5[%c0_14, %c0_15] : memref<64x8xf32, #tpu.memory_space<vmem>>, vector<64x8xf32>
    %cst_16 = arith.constant dense<0.000000e+00> : vector<64x128xf32>
    %23 = tpu.matmul %22, %21, %cst_16 {dimension_numbers = #tpu.dot_dimension_numbers<[1], [0], [0], [1], [0, 0, 1, 1], [], []>} : vector<64x8xf32>, vector<8x128xf32>, vector<64x128xf32> -> vector<64x128xf32>
    %c0_17 = arith.constant 0 : index
    %c0_18 = arith.constant 0 : index
    %24 = vector.load %arg6[%c0_17, %c0_18] : memref<64x128xf32, #tpu.memory_space<vmem>>, vector<64x128xf32>
    tpu.vector_store %arg6[%c0_17, %c0_18], %23 {strides = array<i32>} : memref<64x128xf32, #tpu.memory_space<vmem>>, vector<64x128xf32>,
    return
  }
  func.func @transform_0(%arg0: i32) -> (i32, i32) {
    %c0_i32 = arith.constant 0 : i32
    %c0_i32_0 = arith.constant 0 : i32
    return %c0_i32, %arg0 : i32, i32
  }
  func.func @transform_1(%arg0: i32) -> (i32, i32) {
    %c0_i32 = arith.constant 0 : i32
    %c0_i32_0 = arith.constant 0 : i32
    %c0_i32_1 = arith.constant 0 : i32
    return %c0_i32, %c0_i32_0 : i32, i32
  }
  func.func @transform_2(%arg0: i32) -> (i32, i32) {
    %c0_i32 = arith.constant 0 : i32
    %c0_i32_0 = arith.constant 0 : i32
    %c0_i32_1 = arith.constant 0 : i32
    return %c0_i32, %c0_i32_0 : i32, i32
  }
  func.func @transform_3(%arg0: i32) -> (i32, i32) {
    %c0_i32 = arith.constant 0 : i32
    %c0_i32_0 = arith.constant 0 : i32
    %c0_i32_1 = arith.constant 0 : i32
    return %c0_i32, %c0_i32_0 : i32, i32
  }
  func.func @transform_4(%arg0: i32) -> (i32, i32) {
    %c0_i32 = arith.constant 0 : i32
    %c0_i32_0 = arith.constant 0 : i32
    %c0_i32_1 = arith.constant 0 : i32
    return %c0_i32, %c0_i32_0 : i32, i32
  }
  func.func @transform_5(%arg0: i32) -> (i32, i32) {
    %c0_i32 = arith.constant 0 : i32
    %c0_i32_0 = arith.constant 0 : i32
    return %c0_i32, %arg0 : i32, i32
  }
}

</mosaic_0001>

<llo_original>
// kernel: tpu_custom_call.1
$region0: #{tpu_custom_call.1}
  #allocation0 [shape = 'u32[]', space=smem, size = 0x4, offset = 0x4, fixed_abs, tag = 'smem constant byte address 0x4 - core index']
  #allocation1 [shape = 'u32[144,128]{1,0:T(1,128)}', space=vmem, size = 0x12000, scoped, tag = 'internal scratch']
  %s0 = inlined_call_operand.hbm [shape: f32[97,128], index: 0, kind: input, shape index: {}]
  %s1 = inlined_call_operand.vmem [shape: f32[65,97], index: 1, kind: input, shape index: {}]
  %s2 = inlined_call_operand.hbm [shape: f32[33,65], index: 2, kind: input, shape index: {}]
  %s3 = inlined_call_operand.hbm [shape: f32[8,33], index: 3, kind: input, shape index: {}]
  %s4 = inlined_call_operand.vmem [shape: f32[64,8], index: 4, kind: input, shape index: {}]
  %s5 = inlined_call_operand.hbm [shape: f32[64,128], index: 5, kind: output, shape index: {}]
  %s6 = sld [smem:[#allocation0]]
  $region42: #{tpu_custom_call.1} parent=0
    _
  %s8 = ssub.s32 1, %s6
  %s9 = scalar_select 0, %s8, %s6
  $region1: #{tpu_custom_call.1} parent=0
    #allocation2 [shape = 'u8[53248]{0}', space=vmem, size = 0xd000, scoped, tag = 'input window, operand 0, single buffered']
    #allocation3 [shape = 's32[1]{0}', space=sflag, size = 0x4, scoped, tag = 'scoped memory for tpu_custom_call.1']
    #allocation4 [shape = 's32[1]{0}', space=sflag, size = 0x4, scoped, tag = 'scoped memory for tpu_custom_call.1']
    #allocation5 [shape = 'u8[20480]{0}', space=vmem, size = 0x5000, scoped, tag = 'input window, operand 2, single buffered']
    #allocation6 [shape = 's32[1]{0}', space=sflag, size = 0x4, scoped, tag = 'scoped memory for tpu_custom_call.1']
    #allocation7 [shape = 'u8[4096]{0}', space=vmem, size = 0x1000, scoped, tag = 'input window, operand 3, single buffered']
    #allocation8 [shape = 'u8[32768]{0}', space=vmem, size = 0x8000, scoped, tag = 'output window, operand 0, single buffered']
    %10 = vsyncpa [#allocation3], 0
    %11 = vsyncpa [#allocation6], 0
    %12 = vsyncpa [#allocation4], 0
    // Predicated region
    $region2: #{tpu_custom_call.1} parent=1 // pred_check
      _
    $region3: #{tpu_custom_call.1} parent=1 // pred_check_branch
      %14 = sbr.rel (0) target = $region5
    $region4: #{tpu_custom_call.1} parent=1 // pred_region
      %s16 = ssub.s32 1664, 1664
      %17 = vsyncadd [#allocation3], %s16
      %s18 = sshll.u32 [#allocation2], 4
      %s19 = int_to_ptr.vmem [resolvable:$true] %s18
      %24 = dma.hbm_to_vmem [thread:$0]  %s0, 1664, %s19, [#allocation3], 128, 128, 8
    $region5: #{tpu_custom_call.1} parent=1 // pred_fallthru
      _
    // Predicated region
    $region6: #{tpu_custom_call.1} parent=1 // pred_check
      _
    $region7: #{tpu_custom_call.1} parent=1 // pred_check_branch
      %26 = sbr.rel (0) target = $region9
    $region8: #{tpu_custom_call.1} parent=1 // pred_region
      _
    $region9: #{tpu_custom_call.1} parent=1 // pred_fallthru
      _
    // Predicated region
    $region10: #{tpu_custom_call.1} parent=1 // pred_check
      _
    $region11: #{tpu_custom_call.1} parent=1 // pred_check_branch
      %28 = sbr.rel (0) target = $region13
    $region12: #{tpu_custom_call.1} parent=1 // pred_region
      %s30 = ssub.s32 640, 640
      %31 = vsyncadd [#allocation6], %s30
      %s32 = sshll.u32 [#allocation5], 4
      %s33 = int_to_ptr.vmem [resolvable:$true] %s32
      %38 = dma.hbm_to_vmem [thread:$0]  %s2, 640, %s33, [#allocation6], 128, 128, 8
    $region13: #{tpu_custom_call.1} parent=1 // pred_fallthru
      _
    // Predicated region
    $region14: #{tpu_custom_call.1} parent=1 // pred_check
      _
    $region15: #{tpu_custom_call.1} parent=1 // pred_check_branch
      %40 = sbr.rel (0) target = $region17
    $region16: #{tpu_custom_call.1} parent=1 // pred_region
      %s42 = ssub.s32 128, 128
      %43 = vsyncadd [#allocation6], %s42
      %s45 = sshll.u32 [#allocation7], 4
      %s46 = int_to_ptr.vmem [resolvable:$true] %s45
      %48 = dma.hbm_to_vmem [thread:$0]  %s3, 128, %s46, [#allocation6]
    $region17: #{tpu_custom_call.1} parent=1 // pred_fallthru
      _
    // Predicated region
    $region18: #{tpu_custom_call.1} parent=1 // pred_check
      _
    $region19: #{tpu_custom_call.1} parent=1 // pred_check_branch
      %50 = sbr.rel (0) target = $region21
    $region20: #{tpu_custom_call.1} parent=1 // pred_region
      _
    $region21: #{tpu_custom_call.1} parent=1 // pred_fallthru
      _
    // Predicated region
    $region22: #{tpu_custom_call.1} parent=1 // pred_check
      _
    $region23: #{tpu_custom_call.1} parent=1 // pred_check_branch
      %52 = sbr.rel (0) target = $region25
    $region24: #{tpu_custom_call.1} parent=1 // pred_region
      %53 = dma.done [#allocation3], 1664
    $region25: #{tpu_custom_call.1} parent=1 // pred_fallthru
      _
    // Predicated region
    $region26: #{tpu_custom_call.1} parent=1 // pred_check
      _
    $region27: #{tpu_custom_call.1} parent=1 // pred_check_branch
      %55 = sbr.rel (0) target = $region29
    $region28: #{tpu_custom_call.1} parent=1 // pred_region
      %56 = dma.done [#allocation6], 640
    $region29: #{tpu_custom_call.1} parent=1 // pred_fallthru
      _
    // Predicated region
    $region30: #{tpu_custom_call.1} parent=1 // pred_check
      _
    $region31: #{tpu_custom_call.1} parent=1 // pred_check_branch
      %58 = sbr.rel (0) target = $region33
    $region32: #{tpu_custom_call.1} parent=1 // pred_region
      %59 = dma.done [#allocation6], 128
    $region33: #{tpu_custom_call.1} parent=1 // pred_fallthru
      _
    %v60 = vld [vmem:[%s1] sm:$0xff]
    %v61 = vld [vmem:[%s1 + $0x8] sm:$0xff]
    %v62 = vld [vmem:[%s1 + $0x10] sm:$0xff]
    %v63 = vld [vmem:[%s1 + $0x18] sm:$0xff]
    %v64 = vld [vmem:[%s1 + $0x20] sm:$0xff]
    %v65 = vld [vmem:[%s1 + $0x28] sm:$0xff]
    %v66 = vld [vmem:[%s1 + $0x30] sm:$0xff]
    %v67 = vld [vmem:[%s1 + $0x38] sm:$0xff]
    %v68 = vld [vmem:[%s1 + $0x40] sm:$0x1]
    %v69 = vld [vmem:[#allocation2] sm:$0xff]
    %v70 = vld [vmem:[#allocation2 + $0x8] sm:$0xff]
    %v71 = vld [vmem:[#allocation2 + $0x10] sm:$0xff]
    %v72 = vld [vmem:[#allocation2 + $0x18] sm:$0xff]
    %v73 = vld [vmem:[#allocation2 + $0x20] sm:$0xff]
    %v74 = vld [vmem:[#allocation2 + $0x28] sm:$0xff]
    %v75 = vld [vmem:[#allocation2 + $0x30] sm:$0xff]
    %v76 = vld [vmem:[#allocation2 + $0x38] sm:$0xff]
    %v77 = vld [vmem:[#allocation2 + $0x40] sm:$0xff]
    %v78 = vld [vmem:[#allocation2 + $0x48] sm:$0xff]
    %v79 = vld [vmem:[#allocation2 + $0x50] sm:$0xff]
    %v80 = vld [vmem:[#allocation2 + $0x58] sm:$0xff]
    %v81 = vld [vmem:[#allocation2 + $0x60] sm:$0x1]
    %vm82 = vcmask 793600
    %v84 = vsel %vm82, %v60, 0
    %v87 = vsel %vm82, %v61, 0
    %v90 = vsel %vm82, %v62, 0
    %v93 = vsel %vm82, %v63, 0
    %v96 = vsel %vm82, %v64, 0
    %v99 = vsel %vm82, %v65, 0
    %v102 = vsel %vm82, %v66, 0
    %v105 = vsel %vm82, %v67, 0
    %v108 = vsel %vm82, %v68, 0
    %vm110 = vcmask 1040384
    %v112 = vsel %vm110, %v81, 0
    %114 = vmatprep.subr.mxu0 0.0
    %115 = vmatpush1.msra.mxu0 0.0
    %116 = vmatprep.subr.mxu0 0.0
    %117 = vmatpush1.msra.mxu0 0.0
    %118 = vmatprep.subr.mxu0 0.0
    %119 = vmatpush1.msra.mxu0 0.0
    %120 = vmatprep.subr.mxu0 0.0
    %121 = vmatpush1.msra.mxu0 %v112
    %122 = vmatprep.subr.mxu0 0.0
    %123 = vmatpush1.msra.mxu0 %v80
    %124 = vmatprep.subr.mxu0 0.0
    %125 = vmatpush1.msra.mxu0 %v79
    %126 = vmatprep.subr.mxu0 0.0
    %127 = vmatpush1.msra.mxu0 %v78
    %128 = vmatprep.subr.mxu0 0.0
    %129 = vmatpush1.msra.mxu0 %v77
    %130 = vmatprep.subr.mxu0 0.0
    %131 = vmatpush1.msra.mxu0 %v76
    %132 = vmatprep.subr.mxu0 0.0
    %133 = vmatpush1.msra.mxu0 %v75
    %134 = vmatprep.subr.mxu0 0.0
    %135 = vmatpush1.msra.mxu0 %v74
    %136 = vmatprep.subr.mxu0 0.0
    %137 = vmatpush1.msra.mxu0 %v73
    %138 = vmatprep.subr.mxu0 0.0
    %139 = vmatpush1.msra.mxu0 %v72
    %140 = vmatprep.subr.mxu0 0.0
    %141 = vmatpush1.msra.mxu0 %v71
    %142 = vmatprep.subr.mxu0 0.0
    %143 = vmatpush1.msra.mxu0 %v70
    %144 = vmatprep.subr.mxu0 0.0
    %145 = vmatpush1.msra.mxu0 %v69
    %146 = vmatprep.subr.mxu0 0.0
    %147 = vmatpush2.msra.mxu0 0.0
    %148 = vmatprep.subr.mxu0 0.0
    %149 = vmatpush2.msra.mxu0 0.0
    %150 = vmatprep.subr.mxu0 0.0
    %151 = vmatpush2.msra.mxu0 0.0
    %152 = vmatprep.subr.mxu0 0.0
    %153 = vmatpush2.msra.mxu0 0.0
    %154 = vmatprep.subr.mxu0 0.0
    %155 = vmatpush2.msra.mxu0 0.0
    %156 = vmatprep.subr.mxu0 0.0
    %157 = vmatpush2.msra.mxu0 0.0
    %158 = vmatprep.subr.mxu0 0.0
    %159 = vmatpush2.msra.mxu0 0.0
    %160 = vmatprep.subr.mxu0 0.0
    %161 = vmatpush2.msra.mxu0 0.0
    %162 = vmatprep.subr.mxu0 0.0
    %163 = vmatpush2.msra.mxu0 0.0
    %164 = vmatprep.subr.mxu0 0.0
    %165 = vmatpush2.msra.mxu0 0.0
    %166 = vmatprep.subr.mxu0 0.0
    %167 = vmatpush2.msra.mxu0 0.0
    %168 = vmatprep.subr.mxu0 0.0
    %169 = vmatpush2.msra.mxu0 0.0
    %170 = vmatprep.subr.mxu0 0.0
    %171 = vmatpush2.msra.mxu0 0.0
    %172 = vmatprep.subr.mxu0 0.0
    %173 = vmatpush2.msra.mxu0 0.0
    %174 = vmatprep.subr.mxu0 0.0
    %175 = vmatpush2.msra.mxu0 0.0
    %176 = vmatprep.subr.mxu0 0.0
    %177 = vmatpush2.msra.mxu0 0.0
    %178 = vmatprep.mubr.f32.mxu0 0.0
    %179 = vmatmul.mubr.f32.gmra.mxu0 %v84
    %v180 = vpop.f32.mrf.mxu0
    %v181 = vadd.f32 0.0, %v180
    %v182 = vpop.f32.mrf.mxu0
    %183 = vmatprep.mubr.f32.mxu0 0.0
    %184 = vmatmul.mubr.f32.gmra.mxu0 %v87
    %v185 = vpop.f32.mrf.mxu0
    %v186 = vadd.f32 0.0, %v185
    %v187 = vpop.f32.mrf.mxu0
    %188 = vmatprep.mubr.f32.mxu0 0.0
    %189 = vmatmul.mubr.f32.gmra.mxu0 %v90
    %v190 = vpop.f32.mrf.mxu0
    %v191 = vadd.f32 0.0, %v190
    %v192 = vpop.f32.mrf.mxu0
    %193 = vmatprep.mubr.f32.mxu0 0.0
    %194 = vmatmul.mubr.f32.gmra.mxu0 %v93
    %v195 = vpop.f32.mrf.mxu0
    %v196 = vadd.f32 0.0, %v195
    %v197 = vpop.f32.mrf.mxu0
    %198 = vmatprep.mubr.f32.mxu0 0.0
    %199 = vmatmul.mubr.f32.gmra.mxu0 %v96
    %v200 = vpop.f32.mrf.mxu0
    %v201 = vadd.f32 0.0, %v200
    %v202 = vpop.f32.mrf.mxu0
    %203 = vmatprep.mubr.f32.mxu0 0.0
    %204 = vmatmul.mubr.f32.gmra.mxu0 %v99
    %v205 = vpop.f32.mrf.mxu0
    %v206 = vadd.f32 0.0, %v205
    %v207 = vpop.f32.mrf.mxu0
    %208 = vmatprep.mubr.f32.mxu0 0.0
    %209 = vmatmul.mubr.f32.gmra.mxu0 %v102
    %v210 = vpop.f32.mrf.mxu0
    %v211 = vadd.f32 0.0, %v210
    %v212 = vpop.f32.mrf.mxu0
    %213 = vmatprep.mubr.f32.mxu0 0.0
    %214 = vmatmul.mubr.f32.gmra.mxu0 %v105
    %v215 = vpop.f32.mrf.mxu0
    %v216 = vadd.f32 0.0, %v215
    %v217 = vpop.f32.mrf.mxu0
    %218 = vmatprep.mubr.f32.mxu0 0.0
    %219 = vmatmul.mubr.f32.gmra.mxu0 %v108
    %v220 = vpop.f32.mrf.mxu0
    %v221 = vadd.f32 0.0, %v220
    %v222 = vpop.f32.mrf.mxu0
    %223 = vdwg.mxu0
    %vm224 = vcmp.ge.f32.partialorder %v181, 0.0
    %vm225 = vcmp.ge.f32.partialorder %v186, 0.0
    %vm226 = vcmp.ge.f32.partialorder %v191, 0.0
    %vm227 = vcmp.ge.f32.partialorder %v196, 0.0
    %vm228 = vcmp.ge.f32.partialorder %v201, 0.0
    %vm229 = vcmp.ge.f32.partialorder %v206, 0.0
    %vm230 = vcmp.ge.f32.partialorder %v211, 0.0
    %vm231 = vcmp.ge.f32.partialorder %v216, 0.0
    %vm232 = vcmp.ge.f32.partialorder %v221, 0.0
    %v233 = vmul.f32 %v181, 0.01
    %v234 = vmul.f32 %v186, 0.01
    %v235 = vmul.f32 %v191, 0.01
    %v236 = vmul.f32 %v196, 0.01
    %v237 = vmul.f32 %v201, 0.01
    %v238 = vmul.f32 %v206, 0.01
    %v239 = vmul.f32 %v211, 0.01
    %v240 = vmul.f32 %v216, 0.01
    %v241 = vmul.f32 %v221, 0.01
    %v242 = vsel %vm224, %v181, %v233
    %v243 = vsel %vm225, %v186, %v234
    %v244 = vsel %vm226, %v191, %v235
    %v245 = vsel %vm227, %v196, %v236
    %v246 = vsel %vm228, %v201, %v237
    %v247 = vsel %vm229, %v206, %v238
    %v248 = vsel %vm230, %v211, %v239
    %v249 = vsel %vm231, %v216, %v240
    %v250 = vsel %vm232, %v221, %v241
    %v251 = vld [vmem:[#allocation5] sm:$0xff]
    %v252 = vld [vmem:[#allocation5 + $0x8] sm:$0xff]
    %v253 = vld [vmem:[#allocation5 + $0x10] sm:$0xff]
    %v254 = vld [vmem:[#allocation5 + $0x18] sm:$0xff]
    %v255 = vld [vmem:[#allocation5 + $0x20] sm:$0x1]
    %vm256 = vcmask 531456
    %v258 = vsel %vm256, %v251, 0
    %v261 = vsel %vm256, %v252, 0
    %v264 = vsel %vm256, %v253, 0
    %v267 = vsel %vm256, %v254, 0
    %v270 = vsel %vm256, %v255, 0
    %v273 = vsel %vm110, %v250, 0
    %275 = vmatprep.subr.mxu0 0.0
    %276 = vmatpush1.msra.mxu0 0.0
    %277 = vmatprep.subr.mxu0 0.0
    %278 = vmatpush1.msra.mxu0 0.0
    %279 = vmatprep.subr.mxu0 0.0
    %280 = vmatpush1.msra.mxu0 0.0
    %281 = vmatprep.subr.mxu0 0.0
    %282 = vmatpush1.msra.mxu0 0.0
    %283 = vmatprep.subr.mxu0 0.0
    %284 = vmatpush1.msra.mxu0 0.0
    %285 = vmatprep.subr.mxu0 0.0
    %286 = vmatpush1.msra.mxu0 0.0
    %287 = vmatprep.subr.mxu0 0.0
    %288 = vmatpush1.msra.mxu0 0.0
    %289 = vmatprep.subr.mxu0 0.0
    %290 = vmatpush1.msra.mxu0 %v273
    %291 = vmatprep.subr.mxu0 0.0
    %292 = vmatpush1.msra.mxu0 %v249
    %293 = vmatprep.subr.mxu0 0.0
    %294 = vmatpush1.msra.mxu0 %v248
    %295 = vmatprep.subr.mxu0 0.0
    %296 = vmatpush1.msra.mxu0 %v247
    %297 = vmatprep.subr.mxu0 0.0
    %298 = vmatpush1.msra.mxu0 %v246
    %299 = vmatprep.subr.mxu0 0.0
    %300 = vmatpush1.msra.mxu0 %v245
    %301 = vmatprep.subr.mxu0 0.0
    %302 = vmatpush1.msra.mxu0 %v244
    %303 = vmatprep.subr.mxu0 0.0
    %304 = vmatpush1.msra.mxu0 %v243
    %305 = vmatprep.subr.mxu0 0.0
    %306 = vmatpush1.msra.mxu0 %v242
    %307 = vmatprep.subr.mxu0 0.0
    %308 = vmatpush2.msra.mxu0 0.0
    %309 = vmatprep.subr.mxu0 0.0
    %310 = vmatpush2.msra.mxu0 0.0
    %311 = vmatprep.subr.mxu0 0.0
    %312 = vmatpush2.msra.mxu0 0.0
    %313 = vmatprep.subr.mxu0 0.0
    %314 = vmatpush2.msra.mxu0 0.0
    %315 = vmatprep.subr.mxu0 0.0
    %316 = vmatpush2.msra.mxu0 0.0
    %317 = vmatprep.subr.mxu0 0.0
    %318 = vmatpush2.msra.mxu0 0.0
    %319 = vmatprep.subr.mxu0 0.0
    %320 = vmatpush2.msra.mxu0 0.0
    %321 = vmatprep.subr.mxu0 0.0
    %322 = vmatpush2.msra.mxu0 0.0
    %323 = vmatprep.subr.mxu0 0.0
    %324 = vmatpush2.msra.mxu0 0.0
    %325 = vmatprep.subr.mxu0 0.0
    %326 = vmatpush2.msra.mxu0 0.0
    %327 = vmatprep.subr.mxu0 0.0
    %328 = vmatpush2.msra.mxu0 0.0
    %329 = vmatprep.subr.mxu0 0.0
    %330 = vmatpush2.msra.mxu0 0.0
    %331 = vmatprep.subr.mxu0 0.0
    %332 = vmatpush2.msra.mxu0 0.0
    %333 = vmatprep.subr.mxu0 0.0
    %334 = vmatpush2.msra.mxu0 0.0
    %335 = vmatprep.subr.mxu0 0.0
    %336 = vmatpush2.msra.mxu0 0.0
    %337 = vmatprep.subr.mxu0 0.0
    %338 = vmatpush2.msra.mxu0 0.0
    %339 = vmatprep.mubr.f32.mxu0 0.0
    %340 = vmatmul.mubr.f32.gmra.mxu0 %v258
    %v341 = vpop.f32.mrf.mxu0
    %v342 = vadd.f32 0.0, %v341
    %v343 = vpop.f32.mrf.mxu0
    %344 = vmatprep.mubr.f32.mxu0 0.0
    %345 = vmatmul.mubr.f32.gmra.mxu0 %v261
    %v346 = vpop.f32.mrf.mxu0
    %v347 = vadd.f32 0.0, %v346
    %v348 = vpop.f32.mrf.mxu0
    %349 = vmatprep.mubr.f32.mxu0 0.0
    %350 = vmatmul.mubr.f32.gmra.mxu0 %v264
    %v351 = vpop.f32.mrf.mxu0
    %v352 = vadd.f32 0.0, %v351
    %v353 = vpop.f32.mrf.mxu0
    %354 = vmatprep.mubr.f32.mxu0 0.0
    %355 = vmatmul.mubr.f32.gmra.mxu0 %v267
    %v356 = vpop.f32.mrf.mxu0
    %v357 = vadd.f32 0.0, %v356
    %v358 = vpop.f32.mrf.mxu0
    %359 = vmatprep.mubr.f32.mxu0 0.0
    %360 = vmatmul.mubr.f32.gmra.mxu0 %v270
    %v361 = vpop.f32.mrf.mxu0
    %v362 = vadd.f32 0.0, %v361
    %v363 = vpop.f32.mrf.mxu0
    %364 = vdwg.mxu0
    %vm365 = vcmp.ge.f32.partialorder %v342, 0.0
    %vm366 = vcmp.ge.f32.partialorder %v347, 0.0
    %vm367 = vcmp.ge.f32.partialorder %v352, 0.0
    %vm368 = vcmp.ge.f32.partialorder %v357, 0.0
    %vm369 = vcmp.ge.f32.partialorder %v362, 0.0
    %v370 = vmul.f32 %v342, 0.01
    %v371 = vmul.f32 %v347, 0.01
    %v372 = vmul.f32 %v352, 0.01
    %v373 = vmul.f32 %v357, 0.01
    %v374 = vmul.f32 %v362, 0.01
    %v375 = vsel %vm365, %v342, %v370
    %v376 = vsel %vm366, %v347, %v371
    %v377 = vsel %vm367, %v352, %v372
    %v378 = vsel %vm368, %v357, %v373
    %v379 = vsel %vm369, %v362, %v374
    %v380 = vld [vmem:[#allocation7] sm:$0xff]
    %vm381 = vcmask 269312
    %v383 = vsel %vm381, %v380, 0
    %v386 = vsel %vm110, %v379, 0
    %388 = vmatprep.subr.mxu0 0.0
    %389 = vmatpush1.msra.mxu0 0.0
    %390 = vmatprep.subr.mxu0 0.0
    %391 = vmatpush1.msra.mxu0 0.0
    %392 = vmatprep.subr.mxu0 0.0
    %393 = vmatpush1.msra.mxu0 0.0
    %394 = vmatprep.subr.mxu0 0.0
    %395 = vmatpush1.msra.mxu0 0.0
    %396 = vmatprep.subr.mxu0 0.0
    %397 = vmatpush1.msra.mxu0 0.0
    %398 = vmatprep.subr.mxu0 0.0
    %399 = vmatpush1.msra.mxu0 0.0
    %400 = vmatprep.subr.mxu0 0.0
    %401 = vmatpush1.msra.mxu0 0.0
    %402 = vmatprep.subr.mxu0 0.0
    %403 = vmatpush1.msra.mxu0 0.0
    %404 = vmatprep.subr.mxu0 0.0
    %405 = vmatpush1.msra.mxu0 0.0
    %406 = vmatprep.subr.mxu0 0.0
    %407 = vmatpush1.msra.mxu0 0.0
    %408 = vmatprep.subr.mxu0 0.0
    %409 = vmatpush1.msra.mxu0 0.0
    %410 = vmatprep.subr.mxu0 0.0
    %411 = vmatpush1.msra.mxu0 %v386
    %412 = vmatprep.subr.mxu0 0.0
    %413 = vmatpush1.msra.mxu0 %v378
    %414 = vmatprep.subr.mxu0 0.0
    %415 = vmatpush1.msra.mxu0 %v377
    %416 = vmatprep.subr.mxu0 0.0
    %417 = vmatpush1.msra.mxu0 %v376
    %418 = vmatprep.subr.mxu0 0.0
    %419 = vmatpush1.msra.mxu0 %v375
    %420 = vmatprep.subr.mxu0 0.0
    %421 = vmatpush2.msra.mxu0 0.0
    %422 = vmatprep.subr.mxu0 0.0
    %423 = vmatpush2.msra.mxu0 0.0
    %424 = vmatprep.subr.mxu0 0.0
    %425 = vmatpush2.msra.mxu0 0.0
    %426 = vmatprep.subr.mxu0 0.0
    %427 = vmatpush2.msra.mxu0 0.0
    %428 = vmatprep.subr.mxu0 0.0
    %429 = vmatpush2.msra.mxu0 0.0
    %430 = vmatprep.subr.mxu0 0.0
    %431 = vmatpush2.msra.mxu0 0.0
    %432 = vmatprep.subr.mxu0 0.0
    %433 = vmatpush2.msra.mxu0 0.0
    %434 = vmatprep.subr.mxu0 0.0
    %435 = vmatpush2.msra.mxu0 0.0
    %436 = vmatprep.subr.mxu0 0.0
    %437 = vmatpush2.msra.mxu0 0.0
    %438 = vmatprep.subr.mxu0 0.0
    %439 = vmatpush2.msra.mxu0 0.0
    %440 = vmatprep.subr.mxu0 0.0
    %441 = vmatpush2.msra.mxu0 0.0
    %442 = vmatprep.subr.mxu0 0.0
    %443 = vmatpush2.msra.mxu0 0.0
    %444 = vmatprep.subr.mxu0 0.0
    %445 = vmatpush2.msra.mxu0 0.0
    %446 = vmatprep.subr.mxu0 0.0
    %447 = vmatpush2.msra.mxu0 0.0
    %448 = vmatprep.subr.mxu0 0.0
    %449 = vmatpush2.msra.mxu0 0.0
    %450 = vmatprep.subr.mxu0 0.0
    %451 = vmatpush2.msra.mxu0 0.0
    %452 = vmatprep.mubr.f32.mxu0 0.0
    %453 = vmatmul.mubr.f32.gmra.mxu0 %v383
    %v454 = vpop.f32.mrf.mxu0
    %v455 = vadd.f32 0.0, %v454
    %v456 = vpop.f32.mrf.mxu0
    %457 = vdwg.mxu0
    %v458 = vxor.u32 %v455, 2147483648
    %v459 = vmul.f32 %v458, 1.442695
    %v460 = vpow.pop %v459
    %v461 = vadd.f32 %v460, 1.0
    %v462 = vrcp.pop %v461
    %v463 = vmul.f32 1.0, %v462
    %v464 = vld [vmem:[%s4] sm:$0xff]
    %v465 = vld [vmem:[%s4 + $0x8] sm:$0xff]
    %v466 = vld [vmem:[%s4 + $0x10] sm:$0xff]
    %v467 = vld [vmem:[%s4 + $0x18] sm:$0xff]
    %v468 = vld [vmem:[%s4 + $0x20] sm:$0xff]
    %v469 = vld [vmem:[%s4 + $0x28] sm:$0xff]
    %v470 = vld [vmem:[%s4 + $0x30] sm:$0xff]
    %v471 = vld [vmem:[%s4 + $0x38] sm:$0xff]
    %vm472 = vcmask 64512
    %v474 = vsel %vm472, %v464, 0
    %v477 = vsel %vm472, %v465, 0
    %v480 = vsel %vm472, %v466, 0
    %v483 = vsel %vm472, %v467, 0
    %v486 = vsel %vm472, %v468, 0
    %v489 = vsel %vm472, %v469, 0
    %v492 = vsel %vm472, %v470, 0
    %v495 = vsel %vm472, %v471, 0
    %497 = vmatprep.subr.mxu0 0.0
    %498 = vmatpush1.msra.mxu0 0.0
    %499 = vmatprep.subr.mxu0 0.0
    %500 = vmatpush1.msra.mxu0 0.0
    %501 = vmatprep.subr.mxu0 0.0
    %502 = vmatpush1.msra.mxu0 0.0
    %503 = vmatprep.subr.mxu0 0.0
    %504 = vmatpush1.msra.mxu0 0.0
    %505 = vmatprep.subr.mxu0 0.0
    %506 = vmatpush1.msra.mxu0 0.0
    %507 = vmatprep.subr.mxu0 0.0
    %508 = vmatpush1.msra.mxu0 0.0
    %509 = vmatprep.subr.mxu0 0.0
    %510 = vmatpush1.msra.mxu0 0.0
    %511 = vmatprep.subr.mxu0 0.0
    %512 = vmatpush1.msra.mxu0 0.0
    %513 = vmatprep.subr.mxu0 0.0
    %514 = vmatpush1.msra.mxu0 0.0
    %515 = vmatprep.subr.mxu0 0.0
    %516 = vmatpush1.msra.mxu0 0.0
    %517 = vmatprep.subr.mxu0 0.0
    %518 = vmatpush1.msra.mxu0 0.0
    %519 = vmatprep.subr.mxu0 0.0
    %520 = vmatpush1.msra.mxu0 0.0
    %521 = vmatprep.subr.mxu0 0.0
    %522 = vmatpush1.msra.mxu0 0.0
    %523 = vmatprep.subr.mxu0 0.0
    %524 = vmatpush1.msra.mxu0 0.0
    %525 = vmatprep.subr.mxu0 0.0
    %526 = vmatpush1.msra.mxu0 0.0
    %527 = vmatprep.subr.mxu0 0.0
    %528 = vmatpush1.msra.mxu0 %v463
    %529 = vmatprep.subr.mxu0 0.0
    %530 = vmatpush2.msra.mxu0 0.0
    %531 = vmatprep.subr.mxu0 0.0
    %532 = vmatpush2.msra.mxu0 0.0
    %533 = vmatprep.subr.mxu0 0.0
    %534 = vmatpush2.msra.mxu0 0.0
    %535 = vmatprep.subr.mxu0 0.0
    %536 = vmatpush2.msra.mxu0 0.0
    %537 = vmatprep.subr.mxu0 0.0
    %538 = vmatpush2.msra.mxu0 0.0
    %539 = vmatprep.subr.mxu0 0.0
    %540 = vmatpush2.msra.mxu0 0.0
    %541 = vmatprep.subr.mxu0 0.0
    %542 = vmatpush2.msra.mxu0 0.0
    %543 = vmatprep.subr.mxu0 0.0
    %544 = vmatpush2.msra.mxu0 0.0
    %545 = vmatprep.subr.mxu0 0.0
    %546 = vmatpush2.msra.mxu0 0.0
    %547 = vmatprep.subr.mxu0 0.0
    %548 = vmatpush2.msra.mxu0 0.0
    %549 = vmatprep.subr.mxu0 0.0
    %550 = vmatpush2.msra.mxu0 0.0
    %551 = vmatprep.subr.mxu0 0.0
    %552 = vmatpush2.msra.mxu0 0.0
    %553 = vmatprep.subr.mxu0 0.0
    %554 = vmatpush2.msra.mxu0 0.0
    %555 = vmatprep.subr.mxu0 0.0
    %556 = vmatpush2.msra.mxu0 0.0
    %557 = vmatprep.subr.mxu0 0.0
    %558 = vmatpush2.msra.mxu0 0.0
    %559 = vmatprep.subr.mxu0 0.0
    %560 = vmatpush2.msra.mxu0 0.0
    %561 = vmatprep.mubr.f32.mxu0 0.0
    %562 = vmatmul.mubr.f32.gmra.mxu0 %v474
    %v563 = vpop.f32.mrf.mxu0
    %v564 = vadd.f32 0.0, %v563
    %v565 = vpop.f32.mrf.mxu0
    %566 = vmatprep.mubr.f32.mxu0 0.0
    %567 = vmatmul.mubr.f32.gmra.mxu0 %v477
    %v568 = vpop.f32.mrf.mxu0
    %v569 = vadd.f32 0.0, %v568
    %v570 = vpop.f32.mrf.mxu0
    %571 = vmatprep.mubr.f32.mxu0 0.0
    %572 = vmatmul.mubr.f32.gmra.mxu0 %v480
    %v573 = vpop.f32.mrf.mxu0
    %v574 = vadd.f32 0.0, %v573
    %v575 = vpop.f32.mrf.mxu0
    %576 = vmatprep.mubr.f32.mxu0 0.0
    %577 = vmatmul.mubr.f32.gmra.mxu0 %v483
    %v578 = vpop.f32.mrf.mxu0
    %v579 = vadd.f32 0.0, %v578
    %v580 = vpop.f32.mrf.mxu0
    %581 = vmatprep.mubr.f32.mxu0 0.0
    %582 = vmatmul.mubr.f32.gmra.mxu0 %v486
    %v583 = vpop.f32.mrf.mxu0
    %v584 = vadd.f32 0.0, %v583
    %v585 = vpop.f32.mrf.mxu0
    %586 = vmatprep.mubr.f32.mxu0 0.0
    %587 = vmatmul.mubr.f32.gmra.mxu0 %v489
    %v588 = vpop.f32.mrf.mxu0
    %v589 = vadd.f32 0.0, %v588
    %v590 = vpop.f32.mrf.mxu0
    %591 = vmatprep.mubr.f32.mxu0 0.0
    %592 = vmatmul.mubr.f32.gmra.mxu0 %v492
    %v593 = vpop.f32.mrf.mxu0
    %v594 = vadd.f32 0.0, %v593
    %v595 = vpop.f32.mrf.mxu0
    %596 = vmatprep.mubr.f32.mxu0 0.0
    %597 = vmatmul.mubr.f32.gmra.mxu0 %v495
    %v598 = vpop.f32.mrf.mxu0
    %v599 = vadd.f32 0.0, %v598
    %v600 = vpop.f32.mrf.mxu0
    %601 = vdwg.mxu0
    %602 = vst [vmem:[#allocation8] sm:$0xff] %v564
    %603 = vst [vmem:[#allocation8 + $0x8] sm:$0xff] %v569
    %604 = vst [vmem:[#allocation8 + $0x10] sm:$0xff] %v574
    %605 = vst [vmem:[#allocation8 + $0x18] sm:$0xff] %v579
    %606 = vst [vmem:[#allocation8 + $0x20] sm:$0xff] %v584
    %607 = vst [vmem:[#allocation8 + $0x28] sm:$0xff] %v589
    %608 = vst [vmem:[#allocation8 + $0x30] sm:$0xff] %v594
    %609 = vst [vmem:[#allocation8 + $0x38] sm:$0xff] %v599
    // Predicated region
    $region34: #{tpu_custom_call.1} parent=1 // pred_check
      _
    $region35: #{tpu_custom_call.1} parent=1 // pred_check_branch
      %611 = sbr.rel (0) target = $region37
    $region36: #{tpu_custom_call.1} parent=1 // pred_region
      %s613 = ssub.s32 1024, 1024
      %614 = vsyncadd [#allocation4], %s613
      %s615 = sshll.u32 [#allocation8], 4
      %s616 = int_to_ptr.vmem [resolvable:$true] %s615
      %621 = dma.vmem_to_hbm [thread:$0]  %s616, 1024, %s5, [#allocation4], 128, 128, 8
    $region37: #{tpu_custom_call.1} parent=1 // pred_fallthru
      _
    // Predicated region
    $region38: #{tpu_custom_call.1} parent=1 // pred_check
      _
    $region39: #{tpu_custom_call.1} parent=1 // pred_check_branch
      %623 = sbr.rel (0) target = $region41
    $region40: #{tpu_custom_call.1} parent=1 // pred_region
      %624 = dma.done [#allocation4], 1024
    $region41: #{tpu_custom_call.1} parent=1 // pred_fallthru
      _
    %625 = vsyncpa [#allocation3], 1
    %626 = vsyncpa [#allocation6], 1
    %627 = vsyncpa [#allocation4], 1

</llo_original>
